<compile_context>
chip_gen: v7x
topology: tpu7x:2x2x1
jax: 0.10.0
libtpu: 0.0.40
codegen_flags: <defaults>
</compile_context>

<pallas_src>
import functools

import jax
import jax.numpy as jnp
from jax.experimental import pallas as pl
from jax.experimental.pallas import tpu as pltpu

IGNORE_INDEX = 255.0
LANES = 128
MAX_BLOCK_ROWS = 4096   # (4096, 128) f32 = 2 MiB per input buffer (x2 double-buffer, x2 inputs).


def _round_up(x, m):
    return ((x + m - 1) // m) * m


def _num_tensorcores():
    """Best-effort TensorCores-per-device (2 on v7x, 1 on v5e/v6e).

    Purely a performance hint: correctness holds for any value because phantom blocks
    skip compute in-kernel."""
    try:
        kind = jax.devices()[0].device_kind.lower()
    except Exception:
        return 1
    return 2 if "7" in kind else 1


def _bcd_partials_kernel(x_ref, t_ref, out_ref, *, total_rows, block_rows, blocks_per_core):
    core = pl.program_id(0)
    step = pl.program_id(1)

    # (8, 128) f32 per-core accumulator, resident across the reduction ("arbitrary") axis.
    @pl.when(step == 0)
    def _():
        out_ref[...] = jnp.zeros_like(out_ref)

    base_row = (core * blocks_per_core + step) * block_rows

    def accumulate(needs_row_mask):
        x = x_ref[...].astype(jnp.float32)   # logits tile (block_rows, 128), native -> f32
        t = t_ref[...].astype(jnp.float32)   # target tile (narrow dtype -> f32)

        valid = t != IGNORE_INDEX
        if needs_row_mask:
            # Last (partial) block only: drop rows past the logical end of the array and
            # sanitize the garbage logits so NaN/Inf never reaches the sums.
            row_ids = jax.lax.broadcasted_iota(jnp.int32, x.shape, 0) + base_row
            valid = valid & (row_ids < total_rows)
            x = jnp.where(valid, x, 0.0)

        m = valid.astype(jnp.float32)
        tv = jnp.where(valid, t, 0.0)        # masked target (ignored / garbage -> 0)

        # Shared transcendental: e = exp(-|x|) feeds both the BCE softplus and the sigmoid.
        e = jnp.exp(-jnp.abs(x))
        # BCEWithLogitsLoss(reduction='none'): max(x,0) - x*t + log(1 + exp(-|x|)).
        # Ignored pixels produce finite garbage here; it is zeroed by * m below.
        bce = jnp.maximum(x, 0.0) - x * tv + jnp.log1p(e)
        # sigmoid(x) = where(x>=0, 1, e) / (1 + e); EUP approx reciprocal (no Newton step).
        prob = jnp.where(x >= 0.0, 1.0, e) * pl.reciprocal(1.0 + e, approx=True)
        pm = prob * m

        zeros = jnp.zeros((x.shape[1],), jnp.float32)
        # Sublane (axis 0) reductions; the lane axis is reduced in the tiny JAX epilogue.
        partial = jnp.stack(
            [
                jnp.sum(bce * m, axis=0),    # masked BCE sum
                jnp.sum(m, axis=0),          # number of valid pixels
                jnp.sum(pm * tv, axis=0),    # dice intersection
                jnp.sum(pm, axis=0),         # masked prob sum (cardinality part 1)
                jnp.sum(tv, axis=0),         # masked target sum (cardinality part 2 / positives)
                zeros, zeros, zeros,         # pad to a full (8, 128) sublane tile
            ],
            axis=0,
        )
        out_ref[...] += partial

    is_full = base_row + block_rows <= total_rows

    # Steady state: full in-range block, no iota / row-mask / sanitize work.
    @pl.when(is_full)
    def _():
        accumulate(needs_row_mask=False)

    # Last partial block: row-masked variant.  Fully out-of-range (phantom, clamped)
    # blocks fall through both branches and skip compute entirely.
    @pl.when(jnp.logical_not(is_full) & (base_row < total_rows))
    def _():
        accumulate(needs_row_mask=True)


def _partial_sums_jax(x_flat, t_flat):
    """Pure-JAX partial sums for the <=127-element ragged lane tail."""
    x = x_flat.astype(jnp.float32)
    t = t_flat.astype(jnp.float32)
    valid = t != IGNORE_INDEX
    m = valid.astype(jnp.float32)
    xv = jnp.where(valid, x, 0.0)
    tv = jnp.where(valid, t, 0.0)
    e = jnp.exp(-jnp.abs(xv))
    bce = jnp.maximum(xv, 0.0) - xv * tv + jnp.log1p(e)
    prob = jnp.where(xv >= 0.0, 1.0, e) / (1.0 + e)
    pm = prob * m
    return jnp.stack([jnp.sum(bce * m), jnp.sum(m), jnp.sum(pm * tv), jnp.sum(pm), jnp.sum(tv)])


def bcd_loss(logits, target, loss_weight=(1.0, 1.0), smooth=0.0, eps=1e-7):
    # Mimic PyTorch: squeeze channel dim when logits is (B, 1, H, W) and target is (B, H, W).
    if logits.ndim != target.ndim and logits.shape[1] == 1:
        logits = jnp.squeeze(logits, axis=1)

    # Keep native dtypes (bf16 logits / uint8 labels); the kernel casts to f32 per-tile,
    # so no extra whole-array cast or pad op touches HBM.
    x = logits.reshape(-1)
    t = target.reshape(-1)

    n = x.shape[0]
    n_main = (n // LANES) * LANES

    tail = None
    if n_main != n:
        # Ragged lane tail (<=127 elements): reduce in plain JAX instead of a whole-array pad.
        tail = _partial_sums_jax(x[n_main:], t[n_main:])
        x = x[:n_main]      # offset-0 contiguous prefix
        t = t[:n_main]

    rows = n_main // LANES
    if rows == 0:
        sums = tail
    else:
        x2 = x.reshape(rows, LANES)
        t2 = t.reshape(rows, LANES)

        # Block rows: multiple of 32 (f32 / bf16 / int8 min-tile safe), capped at MAX_BLOCK_ROWS.
        br = min(MAX_BLOCK_ROWS, _round_up(rows, 32))
        nb = pl.cdiv(rows, br)                   # total row-blocks
        num_cores = min(_num_tensorcores(), nb)  # never split fewer blocks than cores
        nbc = pl.cdiv(nb, num_cores)             # blocks per core

        def in_index_map(core, step):
            # Clamp phantom block indices (odd nb split across cores) into range; their
            # compute is skipped in-kernel (base_row >= total_rows).
            return (jnp.minimum(core * nbc + step, nb - 1), 0)

        kernel = functools.partial(
            _bcd_partials_kernel,
            total_rows=rows, block_rows=br, blocks_per_core=nbc)

        # Reduction axis is "arbitrary" (resident accumulator).  The core axis is only
        # emitted on dual-TC chips and then marked CORE_PARALLEL (plain "parallel" is a
        # measured near-no-op for the per-core split).
        core_sem = pltpu.CORE_PARALLEL if num_cores > 1 else pltpu.ARBITRARY

        partials = pl.pallas_call(
            kernel,
            out_shape=jax.ShapeDtypeStruct((num_cores, 8, LANES), jnp.float32),
            grid_spec=pltpu.PrefetchScalarGridSpec(
                num_scalar_prefetch=0,
                grid=(num_cores, nbc),
                in_specs=[
                    pl.BlockSpec((br, LANES), in_index_map),
                    pl.BlockSpec((br, LANES), in_index_map),
                ],
                out_specs=pl.BlockSpec((None, 8, LANES), lambda core, step: (core, 0, 0)),
            ),
            compiler_params=pltpu.CompilerParams(
                dimension_semantics=(core_sem, pltpu.ARBITRARY),
            ),
            cost_estimate=pl.CostEstimate(
                flops=16 * int(n),
                transcendentals=3 * int(n),
                bytes_accessed=int(x2.nbytes) + int(t2.nbytes) + num_cores * 8 * LANES * 4,
            ),
        )(x2, t2)

        sums = jnp.sum(partials, axis=(0, 2))[:5]
        if tail is not None:
            sums = sums + tail

    bce_sum, valid_cnt, inter, pm_sum, t_sum = sums[0], sums[1], sums[2], sums[3], sums[4]

    # BCEWithIgnoreLoss (OHEM=False): mean BCE over valid pixels (NaN if all ignored,
    # matching the PyTorch reference).
    # TODO(synk): OHEM=True branch (global sort-based hard-example mining) not implemented;
    # the module default (OHEM=False) is what is translated.
    bce_loss = bce_sum / valid_cnt

    # DiceLoss(mode='binary', ignore_index=255, from_logits=True, smooth=0, eps=1e-7);
    # cardinality = sum(p) + sum(t) reconstructed here instead of a per-element add.
    card = pm_sum + t_sum
    dice_score = (2.0 * inter + smooth) / jnp.maximum(card + smooth, eps)
    dice_loss = (1.0 - dice_score) * (t_sum > 0).astype(jnp.float32)

    return loss_weight[0] * bce_loss + loss_weight[1] * dice_loss


def _reference_loss(logits, target):
    # Pure-JAX reference with the PyTorch module's semantics (exact sigmoid divide).
    if logits.ndim != target.ndim and logits.shape[1] == 1:
        logits = jnp.squeeze(logits, axis=1)
    x = logits.astype(jnp.float32)
    t = target.astype(jnp.float32)
    mask = (t != IGNORE_INDEX).astype(jnp.float32)
    tm = t * mask
    bce = jnp.maximum(x, 0.0) - x * tm + jnp.log1p(jnp.exp(-jnp.abs(x)))
    bce_loss = jnp.sum(bce * mask) / jnp.sum(mask)
    p = jax.nn.sigmoid(x)
    pm = p * mask
    inter = jnp.sum(pm * tm)
    card = jnp.sum(pm + tm)
    dice = (2.0 * inter) / jnp.maximum(card, 1e-7)
    dice_loss = (1.0 - dice) * (jnp.sum(tm) > 0).astype(jnp.float32)
    return bce_loss + dice_loss


if __name__ == "__main__":
    key = jax.random.PRNGKey(0)
    k1, k2, k3, k4, k5, k6 = jax.random.split(key, 6)

    # Lane-aligned case.
    B, C, H, W = 2, 1, 16, 16
    logits = jax.random.normal(k1, (B, C, H, W), dtype=jnp.float32)
    bits = (jax.random.uniform(k2, (B, H, W)) > 0.5).astype(jnp.uint8)
    ignore_mask = jax.random.uniform(k3, (B, H, W)) < 0.1
    target = jnp.where(ignore_mask, jnp.uint8(255), bits)

    loss = jax.block_until_ready(bcd_loss(logits, target))
    ref = _reference_loss(logits, target)
    # 2e-3 tolerance accommodates the EUP approx-reciprocal sigmoid path (~1e-4 rel shift).
    assert jnp.allclose(loss, ref, rtol=2e-3, atol=2e-3), (loss, ref)

    # Ragged / lane-unaligned case: exercises the in-kernel row mask and the pure-JAX
    # <128-element lane-tail path (no whole-array pad).
    H2, W2 = 15, 15
    logits2 = jax.random.normal(k4, (B, 1, H2, W2), dtype=jnp.float32)
    bits2 = (jax.random.uniform(k5, (B, H2, W2)) > 0.5).astype(jnp.uint8)
    ign2 = jax.random.uniform(k6, (B, H2, W2)) < 0.1
    target2 = jnp.where(ign2, jnp.uint8(255), bits2)

    loss2 = jax.block_until_ready(bcd_loss(logits2, target2))
    ref2 = _reference_loss(logits2, target2)
    assert jnp.allclose(loss2, ref2, rtol=2e-3, atol=2e-3), (loss2, ref2)

    print("KERNEL_OK")
</pallas_src>

<mosaic_0001>
module attributes {stable_mosaic.version = 11 : i64} {
  func.func @_bcd_partials_kernel(%arg0: i32, %arg1: i32, %arg2: memref<32x128xf32, #tpu.memory_space<vmem>>, %arg3: memref<32x128xi8, #tpu.memory_space<vmem>>, %arg4: memref<1x8x128xf32, #tpu.memory_space<vmem>>) attributes {dimension_semantics = [#tpu.dimension_semantics<arbitrary>, #tpu.dimension_semantics<arbitrary>], iteration_bounds = array<i64: 1, 1>, scalar_prefetch = 0 : i64, scratch_operands = 0 : i64, tpu.core_type = #tpu.core_type<tc>, window_params = [{transform_indices = @transform_0, window_bounds = array<i64: 32, 128>}, {transform_indices = @transform_1, window_bounds = array<i64: 32, 128>}, {transform_indices = @transform_2, window_bounds = array<i64: 1, 8, 128>}]} {
    %c0_i32 = arith.constant 0 : i32
    %0 = arith.cmpi eq, %arg1, %c0_i32 : i32
    %1 = arith.extui %0 : i1 to i32
    %c0_i32_0 = arith.constant 0 : i32
    %2 = arith.cmpi ne, %1, %c0_i32_0 : i32
    scf.if %2 {
      %cst = arith.constant 0.000000e+00 : f32
      %15 = vector.broadcast %cst : f32 to vector<8x128xf32>
      %c0 = arith.constant 0 : index
      %c0_5 = arith.constant 0 : index
      %c0_6 = arith.constant 0 : index
      %16 = vector.load %arg4[%c0, %c0_5, %c0_6] : memref<1x8x128xf32, #tpu.memory_space<vmem>>, vector<1x8x128xf32>
      %17 = vector.shape_cast %16 : vector<1x8x128xf32> to vector<8x128xf32>
      %18 = vector.shape_cast %15 : vector<8x128xf32> to vector<1x8x128xf32>
      tpu.vector_store %arg4[%c0, %c0_5, %c0_6], %18 {strides = array<i32>} : memref<1x8x128xf32, #tpu.memory_space<vmem>>, vector<1x8x128xf32>,
    } else {
    }
    %c1_i32 = arith.constant 1 : i32
    %3 = arith.muli %arg0, %c1_i32 : i32
    %4 = arith.addi %3, %arg1 : i32
    %c32_i32 = arith.constant 32 : i32
    %5 = arith.muli %4, %c32_i32 : i32
    %c32_i32_1 = arith.constant 32 : i32
    %6 = arith.addi %5, %c32_i32_1 : i32
    %c4_i32 = arith.constant 4 : i32
    %7 = arith.cmpi sle, %6, %c4_i32 : i32
    %8 = arith.extui %7 : i1 to i32
    %c0_i32_2 = arith.constant 0 : i32
    %9 = arith.cmpi ne, %8, %c0_i32_2 : i32
    scf.if %9 {
      %c0 = arith.constant 0 : index
      %c0_5 = arith.constant 0 : index
      %15 = vector.load %arg2[%c0, %c0_5] : memref<32x128xf32, #tpu.memory_space<vmem>>, vector<32x128xf32>
      %c0_6 = arith.constant 0 : index
      %c0_7 = arith.constant 0 : index
      %16 = vector.load %arg3[%c0_6, %c0_7] : memref<32x128xi8, #tpu.memory_space<vmem>>, vector<32x128xi8>
      %17 = arith.uitofp %16 : vector<32x128xi8> to vector<32x128xf32>
      %cst = arith.constant 2.550000e+02 : f32
      %18 = vector.broadcast %cst : f32 to vector<32x128xf32>
      %19 = arith.cmpf one, %17, %18 : vector<32x128xf32>
      %20 = arith.extui %19 : vector<32x128xi1> to vector<32x128xi32>
      %21 = arith.sitofp %20 : vector<32x128xi32> to vector<32x128xf32>
      %cst_8 = arith.constant 0.000000e+00 : f32
      %22 = vector.broadcast %cst_8 : f32 to vector<32x128xf32>
      %23 = arith.select %19, %17, %22 : vector<32x128xi1>, vector<32x128xf32>
      %24 = math.absf %15 : vector<32x128xf32>
      %cst_9 = arith.constant 0.000000e+00 : f32
      %25 = vector.broadcast %cst_9 : f32 to vector<32x128xf32>
      %26 = arith.subf %25, %24 : vector<32x128xf32>
      %27 = math.exp %26 : vector<32x128xf32>
      %cst_10 = arith.constant 0.000000e+00 : f32
      %28 = vector.broadcast %cst_10 : f32 to vector<32x128xf32>
      %29 = arith.maximumf %15, %28 : vector<32x128xf32>
      %30 = arith.mulf %15, %23 : vector<32x128xf32>
      %31 = arith.subf %29, %30 : vector<32x128xf32>
      %32 = math.log1p %27 : vector<32x128xf32>
      %33 = arith.addf %31, %32 : vector<32x128xf32>
      %cst_11 = arith.constant 0.000000e+00 : f32
      %34 = vector.broadcast %cst_11 : f32 to vector<32x128xf32>
      %35 = arith.cmpf oge, %15, %34 : vector<32x128xf32>
      %cst_12 = arith.constant 1.000000e+00 : f32
      %36 = vector.broadcast %cst_12 : f32 to vector<32x128xf32>
      %37 = arith.select %35, %36, %27 : vector<32x128xi1>, vector<32x128xf32>
      %cst_13 = arith.constant 1.000000e+00 : f32
      %38 = vector.broadcast %cst_13 : f32 to vector<32x128xf32>
      %39 = arith.addf %38, %27 : vector<32x128xf32>
      %40 = tpu.reciprocal %39 {approx = true} : vector<32x128xf32> -> vector<32x128xf32>
      %41 = arith.mulf %37, %40 : vector<32x128xf32>
      %42 = arith.mulf %41, %21 : vector<32x128xf32>
      %cst_14 = arith.constant 0.000000e+00 : f32
      %43 = vector.broadcast %cst_14 : f32 to vector<128xf32>
      %44 = arith.mulf %33, %21 : vector<32x128xf32>
      %cst_15 = arith.constant dense<0.000000e+00> : vector<128xf32>
      %45 = vector.multi_reduction <add>, %44, %cst_15 [0] : vector<32x128xf32> to vector<128xf32>
      %cst_16 = arith.constant dense<0.000000e+00> : vector<128xf32>
      %46 = vector.multi_reduction <add>, %21, %cst_16 [0] : vector<32x128xf32> to vector<128xf32>
      %47 = arith.mulf %42, %23 : vector<32x128xf32>
      %cst_17 = arith.constant dense<0.000000e+00> : vector<128xf32>
      %48 = vector.multi_reduction <add>, %47, %cst_17 [0] : vector<32x128xf32> to vector<128xf32>
      %cst_18 = arith.constant dense<0.000000e+00> : vector<128xf32>
      %49 = vector.multi_reduction <add>, %42, %cst_18 [0] : vector<32x128xf32> to vector<128xf32>
      %cst_19 = arith.constant dense<0.000000e+00> : vector<128xf32>
      %50 = vector.multi_reduction <add>, %23, %cst_19 [0] : vector<32x128xf32> to vector<128xf32>
      %51 = vector.shape_cast %45 : vector<128xf32> to vector<1x128xf32>
      %52 = vector.shape_cast %46 : vector<128xf32> to vector<1x128xf32>
      %53 = vector.shape_cast %48 : vector<128xf32> to vector<1x128xf32>
      %54 = vector.shape_cast %49 : vector<128xf32> to vector<1x128xf32>
      %55 = vector.shape_cast %50 : vector<128xf32> to vector<1x128xf32>
      %56 = vector.shape_cast %43 : vector<128xf32> to vector<1x128xf32>
      %57 = vector.shape_cast %43 : vector<128xf32> to vector<1x128xf32>
      %58 = vector.shape_cast %43 : vector<128xf32> to vector<1x128xf32>
      %59 = tpu.concatenate %51, %52, %53, %54, %55, %56, %57, %58 in 0 : vector<1x128xf32>, vector<1x128xf32>, vector<1x128xf32>, vector<1x128xf32>, vector<1x128xf32>, vector<1x128xf32>, vector<1x128xf32>, vector<1x128xf32> -> vector<8x128xf32>
      %c0_20 = arith.constant 0 : index
      %c0_21 = arith.constant 0 : index
      %c0_22 = arith.constant 0 : index
      %60 = vector.load %arg4[%c0_20, %c0_21, %c0_22] : memref<1x8x128xf32, #tpu.memory_space<vmem>>, vector<1x8x128xf32>
      %61 = vector.shape_cast %60 : vector<1x8x128xf32> to vector<8x128xf32>
      %62 = arith.addf %61, %59 : vector<8x128xf32>
      %c0_23 = arith.constant 0 : index
      %c0_24 = arith.constant 0 : index
      %c0_25 = arith.constant 0 : index
      %63 = vector.load %arg4[%c0_23, %c0_24, %c0_25] : memref<1x8x128xf32, #tpu.memory_space<vmem>>, vector<1x8x128xf32>
      %64 = vector.shape_cast %63 : vector<1x8x128xf32> to vector<8x128xf32>
      %65 = vector.shape_cast %62 : vector<8x128xf32> to vector<1x8x128xf32>
      tpu.vector_store %arg4[%c0_23, %c0_24, %c0_25], %65 {strides = array<i32>} : memref<1x8x128xf32, #tpu.memory_space<vmem>>, vector<1x8x128xf32>,
    } else {
    }
    %true = arith.constant true
    %10 = arith.xori %7, %true : i1
    %c4_i32_3 = arith.constant 4 : i32
    %11 = arith.cmpi slt, %5, %c4_i32_3 : i32
    %12 = arith.andi %10, %11 : i1
    %13 = arith.extui %12 : i1 to i32
    %c0_i32_4 = arith.constant 0 : i32
    %14 = arith.cmpi ne, %13, %c0_i32_4 : i32
    scf.if %14 {
      %c0 = arith.constant 0 : index
      %c0_5 = arith.constant 0 : index
      %15 = vector.load %arg2[%c0, %c0_5] : memref<32x128xf32, #tpu.memory_space<vmem>>, vector<32x128xf32>
      %c0_6 = arith.constant 0 : index
      %c0_7 = arith.constant 0 : index
      %16 = vector.load %arg3[%c0_6, %c0_7] : memref<32x128xi8, #tpu.memory_space<vmem>>, vector<32x128xi8>
      %17 = arith.uitofp %16 : vector<32x128xi8> to vector<32x128xf32>
      %cst = arith.constant 2.550000e+02 : f32
      %18 = vector.broadcast %cst : f32 to vector<32x128xf32>
      %19 = arith.cmpf one, %17, %18 : vector<32x128xf32>
      %20 = tpu.iota {dimensions = array<i32: 0>} : vector<32x128xi32>
      %21 = vector.broadcast %5 : i32 to vector<32x128xi32>
      %22 = arith.addi %20, %21 : vector<32x128xi32>
      %c4_i32_8 = arith.constant 4 : i32
      %23 = vector.broadcast %c4_i32_8 : i32 to vector<32x128xi32>
      %24 = arith.cmpi slt, %22, %23 : vector<32x128xi32>
      %25 = arith.andi %19, %24 : vector<32x128xi1>
      %cst_9 = arith.constant 0.000000e+00 : f32
      %26 = vector.broadcast %cst_9 : f32 to vector<32x128xf32>
      %27 = arith.select %25, %15, %26 : vector<32x128xi1>, vector<32x128xf32>
      %28 = arith.extui %25 : vector<32x128xi1> to vector<32x128xi32>
      %29 = arith.sitofp %28 : vector<32x128xi32> to vector<32x128xf32>
      %cst_10 = arith.constant 0.000000e+00 : f32
      %30 = vector.broadcast %cst_10 : f32 to vector<32x128xf32>
      %31 = arith.select %25, %17, %30 : vector<32x128xi1>, vector<32x128xf32>
      %32 = math.absf %27 : vector<32x128xf32>
      %cst_11 = arith.constant 0.000000e+00 : f32
      %33 = vector.broadcast %cst_11 : f32 to vector<32x128xf32>
      %34 = arith.subf %33, %32 : vector<32x128xf32>
      %35 = math.exp %34 : vector<32x128xf32>
      %cst_12 = arith.constant 0.000000e+00 : f32
      %36 = vector.broadcast %cst_12 : f32 to vector<32x128xf32>
      %37 = arith.maximumf %27, %36 : vector<32x128xf32>
      %38 = arith.mulf %27, %31 : vector<32x128xf32>
      %39 = arith.subf %37, %38 : vector<32x128xf32>
      %40 = math.log1p %35 : vector<32x128xf32>
      %41 = arith.addf %39, %40 : vector<32x128xf32>
      %cst_13 = arith.constant 0.000000e+00 : f32
      %42 = vector.broadcast %cst_13 : f32 to vector<32x128xf32>
      %43 = arith.cmpf oge, %27, %42 : vector<32x128xf32>
      %cst_14 = arith.constant 1.000000e+00 : f32
      %44 = vector.broadcast %cst_14 : f32 to vector<32x128xf32>
      %45 = arith.select %43, %44, %35 : vector<32x128xi1>, vector<32x128xf32>
      %cst_15 = arith.constant 1.000000e+00 : f32
      %46 = vector.broadcast %cst_15 : f32 to vector<32x128xf32>
      %47 = arith.addf %46, %35 : vector<32x128xf32>
      %48 = tpu.reciprocal %47 {approx = true} : vector<32x128xf32> -> vector<32x128xf32>
      %49 = arith.mulf %45, %48 : vector<32x128xf32>
      %50 = arith.mulf %49, %29 : vector<32x128xf32>
      %cst_16 = arith.constant 0.000000e+00 : f32
      %51 = vector.broadcast %cst_16 : f32 to vector<128xf32>
      %52 = arith.mulf %41, %29 : vector<32x128xf32>
      %cst_17 = arith.constant dense<0.000000e+00> : vector<128xf32>
      %53 = vector.multi_reduction <add>, %52, %cst_17 [0] : vector<32x128xf32> to vector<128xf32>
      %cst_18 = arith.constant dense<0.000000e+00> : vector<128xf32>
      %54 = vector.multi_reduction <add>, %29, %cst_18 [0] : vector<32x128xf32> to vector<128xf32>
      %55 = arith.mulf %50, %31 : vector<32x128xf32>
      %cst_19 = arith.constant dense<0.000000e+00> : vector<128xf32>
      %56 = vector.multi_reduction <add>, %55, %cst_19 [0] : vector<32x128xf32> to vector<128xf32>
      %cst_20 = arith.constant dense<0.000000e+00> : vector<128xf32>
      %57 = vector.multi_reduction <add>, %50, %cst_20 [0] : vector<32x128xf32> to vector<128xf32>
      %cst_21 = arith.constant dense<0.000000e+00> : vector<128xf32>
      %58 = vector.multi_reduction <add>, %31, %cst_21 [0] : vector<32x128xf32> to vector<128xf32>
      %59 = vector.shape_cast %53 : vector<128xf32> to vector<1x128xf32>
      %60 = vector.shape_cast %54 : vector<128xf32> to vector<1x128xf32>
      %61 = vector.shape_cast %56 : vector<128xf32> to vector<1x128xf32>
      %62 = vector.shape_cast %57 : vector<128xf32> to vector<1x128xf32>
      %63 = vector.shape_cast %58 : vector<128xf32> to vector<1x128xf32>
      %64 = vector.shape_cast %51 : vector<128xf32> to vector<1x128xf32>
      %65 = vector.shape_cast %51 : vector<128xf32> to vector<1x128xf32>
      %66 = vector.shape_cast %51 : vector<128xf32> to vector<1x128xf32>
      %67 = tpu.concatenate %59, %60, %61, %62, %63, %64, %65, %66 in 0 : vector<1x128xf32>, vector<1x128xf32>, vector<1x128xf32>, vector<1x128xf32>, vector<1x128xf32>, vector<1x128xf32>, vector<1x128xf32>, vector<1x128xf32> -> vector<8x128xf32>
      %c0_22 = arith.constant 0 : index
      %c0_23 = arith.constant 0 : index
      %c0_24 = arith.constant 0 : index
      %68 = vector.load %arg4[%c0_22, %c0_23, %c0_24] : memref<1x8x128xf32, #tpu.memory_space<vmem>>, vector<1x8x128xf32>
      %69 = vector.shape_cast %68 : vector<1x8x128xf32> to vector<8x128xf32>
      %70 = arith.addf %69, %67 : vector<8x128xf32>
      %c0_25 = arith.constant 0 : index
      %c0_26 = arith.constant 0 : index
      %c0_27 = arith.constant 0 : index
      %71 = vector.load %arg4[%c0_25, %c0_26, %c0_27] : memref<1x8x128xf32, #tpu.memory_space<vmem>>, vector<1x8x128xf32>
      %72 = vector.shape_cast %71 : vector<1x8x128xf32> to vector<8x128xf32>
      %73 = vector.shape_cast %70 : vector<8x128xf32> to vector<1x8x128xf32>
      tpu.vector_store %arg4[%c0_25, %c0_26, %c0_27], %73 {strides = array<i32>} : memref<1x8x128xf32, #tpu.memory_space<vmem>>, vector<1x8x128xf32>,
    } else {
    }
    return
  }
  func.func @transform_0(%arg0: i32, %arg1: i32) -> (i32, i32) {
    %c1_i32 = arith.constant 1 : i32
    %0 = arith.muli %arg0, %c1_i32 : i32
    %1 = arith.addi %0, %arg1 : i32
    %c0_i32 = arith.constant 0 : i32
    %2 = arith.minsi %1, %c0_i32 : i32
    %c0_i32_0 = arith.constant 0 : i32
    %c0_i32_1 = arith.constant 0 : i32
    return %2, %c0_i32_0 : i32, i32
  }
  func.func @transform_1(%arg0: i32, %arg1: i32) -> (i32, i32) {
    %c1_i32 = arith.constant 1 : i32
    %0 = arith.muli %arg0, %c1_i32 : i32
    %1 = arith.addi %0, %arg1 : i32
    %c0_i32 = arith.constant 0 : i32
    %2 = arith.minsi %1, %c0_i32 : i32
    %c0_i32_0 = arith.constant 0 : i32
    %c0_i32_1 = arith.constant 0 : i32
    return %2, %c0_i32_0 : i32, i32
  }
  func.func @transform_2(%arg0: i32, %arg1: i32) -> (i32, i32, i32) {
    %c0_i32 = arith.constant 0 : i32
    %c0_i32_0 = arith.constant 0 : i32
    %c0_i32_1 = arith.constant 0 : i32
    return %arg0, %c0_i32, %c0_i32_0 : i32, i32, i32
  }
}

</mosaic_0001>

<llo_original>
// kernel: tpu_custom_call.1
$region0: #{tpu_custom_call.1}
  #allocation0 [shape = 'u32[]', space=smem, size = 0x4, offset = 0x4, fixed_abs, tag = 'smem constant byte address 0x4 - core index']
  #allocation1 [shape = 'u32[144,128]{1,0:T(1,128)}', space=vmem, size = 0x12000, scoped, tag = 'internal scratch']
  %s0 = inlined_call_operand.hbm [shape: f32[4,128], index: 0, kind: input, shape index: {}]
  %s1 = inlined_call_operand.vmem [shape: u8[4,128], index: 1, kind: input, shape index: {}]
  %s2 = inlined_call_operand.hbm [shape: f32[1,8,128], index: 2, kind: output, shape index: {}]
  %s3 = sld [smem:[#allocation0]]
  $region34: #{tpu_custom_call.1} parent=0
    _
  %s5 = ssub.s32 1, %s3
  %s6 = scalar_select 0, %s5, %s3
  $region1: #{tpu_custom_call.1} parent=0
    #allocation2 [shape = 'u8[16384]{0}', space=vmem, size = 0x4000, scoped, tag = 'input window, operand 0, single buffered']
    #allocation3 [shape = 's32[1]{0}', space=sflag, size = 0x4, scoped, tag = 'scoped memory for tpu_custom_call.1']
    #allocation4 [shape = 's32[1]{0}', space=sflag, size = 0x4, scoped, tag = 'scoped memory for tpu_custom_call.1']
    #allocation5 [shape = 'u8[4096]{0}', space=vmem, size = 0x1000, scoped, tag = 'output window, operand 0, single buffered']
    %7 = vsyncpa [#allocation3], 0
    %8 = vsyncpa [#allocation4], 0
    // Predicated region
    $region2: #{tpu_custom_call.1} parent=1 // pred_check
      _
    $region3: #{tpu_custom_call.1} parent=1 // pred_check_branch
      %10 = sbr.rel (0) target = $region5
    $region4: #{tpu_custom_call.1} parent=1 // pred_region
      %s11 = sadd.s32 0, 0
      %p12 = scmp.lt.s32.totalorder %s11, 0
      %s13 = scalar_select %p12, %s11, 0
      %s14 = smul.u32 8, %s13
      %s15 = ssub.s32 1, %s14
      %s16 = smul.u32 64, %s15
      %s18 = ssub.s32 512, %s16
      %19 = vsyncadd [#allocation3], %s18
      %p20 = scmp.ne.s32.totalorder 0, %s16
      %s21 = smul.addr %s14, 64
      %s22 = scalar_lea.hbm %s0, %s21
      %s23 = smul.u32 4, %s15
      %s24 = sshll.u32 [#allocation2], 4
      %s25 = int_to_ptr.vmem [resolvable:$true] %s24
      %s26 = sshll.u32 %s23, 4
      %30 = dma.hbm_to_vmem [thread:$0]  (%p20), %s22, %s26, %s25, [#allocation3], 64, 64, 4
    $region5: #{tpu_custom_call.1} parent=1 // pred_fallthru
      _
    // Predicated region
    $region6: #{tpu_custom_call.1} parent=1 // pred_check
      _
    $region7: #{tpu_custom_call.1} parent=1 // pred_check_branch
      %32 = sbr.rel (0) target = $region9
    $region8: #{tpu_custom_call.1} parent=1 // pred_region
      %s33 = sadd.s32 0, 0
      %p34 = scmp.lt.s32.totalorder %s33, 0
      %s35 = scalar_select %p34, %s33, 0
      %s36 = smul.u32 8, %s35
      %s37 = ssub.s32 1, %s36
      %s38 = smul.u32 16, %s37
      %p39 = scmp.lt.s32.totalorder %s36, 0
      %s40 = scalar_select %p39, %s36, 0
      %s41 = scalar_lea.vmem %s1, %s40
      %s42 = sadd.s32 0, 0
      %p43 = scmp.lt.s32.totalorder %s42, 0
      %s44 = scalar_select %p43, %s42, 0
      %s45 = smul.u32 8, %s44
      %s46 = ssub.s32 1, %s45
      %s47 = smul.u32 16, %s46
    $region9: #{tpu_custom_call.1} parent=1 // pred_fallthru
      _
    // Predicated region
    $region10: #{tpu_custom_call.1} parent=1 // pred_check
      _
    $region11: #{tpu_custom_call.1} parent=1 // pred_check_branch
      %49 = sbr.rel (0) target = $region13
    $region12: #{tpu_custom_call.1} parent=1 // pred_region
      %50 = dma.done [#allocation3], 512
    $region13: #{tpu_custom_call.1} parent=1 // pred_fallthru
      _
    %s51 = sadd.s32 0, 0
    %p52 = scmp.lt.s32.totalorder %s51, 0
    %s53 = scalar_select %p52, %s51, 0
    %s54 = smul.u32 8, %s53
    %s55 = ssub.s32 1, %s54
    %s56 = smul.u32 16, %s55
    %p57 = scmp.lt.s32.totalorder %s54, 0
    %s58 = scalar_select %p57, %s54, 0
    %s59 = scalar_lea.vmem %s1, %s58
    %s60 = sadd.s32 0, 0
    %p61 = scmp.lt.s32.totalorder %s60, 0
    %s62 = scalar_select %p61, %s60, 0
    %s63 = smul.u32 8, %s62
    %s64 = ssub.s32 1, %s63
    %s65 = smul.u32 64, %s64
    %s66 = sadd.s32 0, 0
    %p67 = scmp.lt.s32.totalorder %s66, 0
    %s68 = scalar_select %p67, %s66, 0
    %s69 = smul.u32 8, %s68
    %s70 = ssub.s32 1, %s69
    %s71 = smul.u32 16, %s70
    %p72 = scmp.lt.s32.totalorder %s69, 0
    %s73 = scalar_select %p72, %s69, 0
    %s74 = scalar_lea.vmem %s1, %s73
    %s75 = sadd.s32 0, 0
    %p76 = scmp.lt.s32.totalorder %s75, 0
    %s77 = scalar_select %p76, %s75, 0
    %s78 = smul.u32 8, %s77
    %s79 = ssub.s32 1, %s78
    %s80 = smul.u32 16, %s79
    %p81 = scmp.eq.s32.totalorder 0, 0
    // Predicated region
    $region14: #{tpu_custom_call.1} parent=1 // pred_check
      %p82 = pneg %p81
    $region15: #{tpu_custom_call.1} parent=1 // pred_check_branch
      %84 = sbr.rel (%p82) target = $region17
    $region16: #{tpu_custom_call.1} parent=1 // pred_region
      %85 = vst [vmem:[#allocation5] sm:$0xff] 0.0
    $region17: #{tpu_custom_call.1} parent=1 // pred_fallthru
      _
    %s86 = sadd.s32 0, 0
    %s87 = smul.u32 %s86, 32
    %s88 = sadd.s32 %s87, 32
    %p89 = scmp.le.s32.totalorder %s88, 4
    // Predicated region
    $region18: #{tpu_custom_call.1} parent=1 // pred_check
      %p90 = pneg %p89
    $region19: #{tpu_custom_call.1} parent=1 // pred_check_branch
      %92 = sbr.rel (%p90) target = $region21
    $region20: #{tpu_custom_call.1} parent=1 // pred_region
      %v93 = vld [vmem:[#allocation2] sm:$0xff]
      %v94 = vld [vmem:[#allocation2 + $0x8] sm:$0xff]
      %v95 = vld [vmem:[#allocation2 + $0x10] sm:$0xff]
      %v96 = vld [vmem:[#allocation2 + $0x18] sm:$0xff]
      %v97 = vld [vmem:[%s74] sm:$0x1]
      %v98 = vld [vmem:[%s74 + $0x1] sm:$0x1]
      %v99 = vld [vmem:[%s74 + $0x2] sm:$0x1]
      %v100 = vld [vmem:[%s74 + $0x3] sm:$0x1]
      %v101 = vld [vmem:[%s74 + $0x4] sm:$0x1]
      %v102 = vld [vmem:[%s74 + $0x5] sm:$0x1]
      %v103 = vld [vmem:[%s74 + $0x6] sm:$0x1]
      %v104 = vld [vmem:[%s74 + $0x7] sm:$0x1]
      %v105 = vunpack.c.0.s8 %v97
      %v106 = vunpack.c.0.s8 %v98
      %v107 = vunpack.c.0.s8 %v99
      %v108 = vunpack.c.0.s8 %v100
      %v109 = vunpack.c.0.s8 %v101
      %v110 = vunpack.c.0.s8 %v102
      %v111 = vunpack.c.0.s8 %v103
      %v112 = vunpack.c.0.s8 %v104
      %v113 = vand.u32 %v105, 255
      %v114 = vand.u32 %v106, 255
      %v115 = vand.u32 %v107, 255
      %v116 = vand.u32 %v108, 255
      %v117 = vand.u32 %v109, 255
      %v118 = vand.u32 %v110, 255
      %v119 = vand.u32 %v111, 255
      %v120 = vand.u32 %v112, 255
      %v121 = vcvt.s32.f32 %v113
      %v122 = vcvt.s32.f32 %v114
      %v123 = vcvt.s32.f32 %v115
      %v124 = vcvt.s32.f32 %v116
      %v125 = vcvt.s32.f32 %v117
      %v126 = vcvt.s32.f32 %v118
      %v127 = vcvt.s32.f32 %v119
      %v128 = vcvt.s32.f32 %v120
      %vm129 = vcmp.ne.f32.partialorder %v121, 255.0
      %vm130 = vcmp.ne.f32.partialorder %v122, 255.0
      %vm131 = vcmp.ne.f32.partialorder %v123, 255.0
      %vm132 = vcmp.ne.f32.partialorder %v124, 255.0
      %vm133 = vcmp.ne.f32.partialorder %v125, 255.0
      %vm134 = vcmp.ne.f32.partialorder %v126, 255.0
      %vm135 = vcmp.ne.f32.partialorder %v127, 255.0
      %vm136 = vcmp.ne.f32.partialorder %v128, 255.0
      %v137 = vsel %vm129, 1, 0
      %v138 = vsel %vm130, 1, 0
      %v139 = vsel %vm131, 1, 0
      %v140 = vsel %vm132, 1, 0
      %v141 = vsel %vm133, 1, 0
      %v142 = vsel %vm134, 1, 0
      %v143 = vsel %vm135, 1, 0
      %v144 = vsel %vm136, 1, 0
      %v145 = vcvt.s32.f32 %v137
      %v146 = vcvt.s32.f32 %v138
      %v147 = vcvt.s32.f32 %v139
      %v148 = vcvt.s32.f32 %v140
      %v149 = vcvt.s32.f32 %v141
      %v150 = vcvt.s32.f32 %v142
      %v151 = vcvt.s32.f32 %v143
      %v152 = vcvt.s32.f32 %v144
      %v153 = vsel %vm129, %v121, 0.0
      %v154 = vsel %vm130, %v122, 0.0
      %v155 = vsel %vm131, %v123, 0.0
      %v156 = vsel %vm132, %v124, 0.0
      %v157 = vsel %vm133, %v125, 0.0
      %v158 = vsel %vm134, %v126, 0.0
      %v159 = vsel %vm135, %v127, 0.0
      %v160 = vsel %vm136, %v128, 0.0
      %v161 = vand.u32 2147483647, %v93
      %v162 = vand.u32 2147483647, %v94
      %v163 = vand.u32 2147483647, %v95
      %v164 = vand.u32 2147483647, %v96
      %v165 = vsub.f32 0.0, %v161
      %v166 = vsub.f32 0.0, %v162
      %v167 = vsub.f32 0.0, %v163
      %v168 = vsub.f32 0.0, %v164
      %v169 = vmul.f32 %v165, 1.442695
      %v170 = vpow.pop %v169
      %v171 = vmul.f32 %v166, 1.442695
      %v172 = vpow.pop %v171
      %v173 = vmul.f32 %v167, 1.442695
      %v174 = vpow.pop %v173
      %v175 = vmul.f32 %v168, 1.442695
      %v176 = vpow.pop %v175
      %v177 = vmax.f32 %v93, 0.0
      %v178 = vmax.f32 %v94, 0.0
      %v179 = vmax.f32 %v95, 0.0
      %v180 = vmax.f32 %v96, 0.0
      %v189 = vcombine.low %v153, %v154
      %v190 = vcombine.low %v155, %v156
      %v191 = vcombine.low %v157, %v158
      %v192 = vcombine.low %v159, %v160
      %v197 = vmul.f32 %v93, %v189
      %v198 = vmul.f32 %v94, %v190
      %v199 = vmul.f32 %v95, %v191
      %v200 = vmul.f32 %v96, %v192
      %v201 = vsub.f32 %v177, %v197
      %v202 = vsub.f32 %v178, %v198
      %v203 = vsub.f32 %v179, %v199
      %v204 = vsub.f32 %v180, %v200
      %v205 = vadd.f32 %v170, 1.0
      %v206 = vlog2.pop %v205
      %v207 = vmul.f32 %v206, 0.6931472
      %v208 = vmul.f32 -0.5, %v170
      %v209 = vadd.f32 %v208, 1.0
      %v210 = vmul.f32 %v209, %v170
      %v211 = vand.u32 2147483647, %v170
      %vm212 = vcmp.lt.f32.partialorder %v211, 0.0004427343
      %v213 = vsel %vm212, %v210, %v207
      %v214 = vadd.f32 %v172, 1.0
      %v215 = vlog2.pop %v214
      %v216 = vmul.f32 %v215, 0.6931472
      %v217 = vmul.f32 -0.5, %v172
      %v218 = vadd.f32 %v217, 1.0
      %v219 = vmul.f32 %v218, %v172
      %v220 = vand.u32 2147483647, %v172
      %vm221 = vcmp.lt.f32.partialorder %v220, 0.0004427343
      %v222 = vsel %vm221, %v219, %v216
      %v223 = vadd.f32 %v174, 1.0
      %v224 = vlog2.pop %v223
      %v225 = vmul.f32 %v224, 0.6931472
      %v226 = vmul.f32 -0.5, %v174
      %v227 = vadd.f32 %v226, 1.0
      %v228 = vmul.f32 %v227, %v174
      %v229 = vand.u32 2147483647, %v174
      %vm230 = vcmp.lt.f32.partialorder %v229, 0.0004427343
      %v231 = vsel %vm230, %v228, %v225
      %v232 = vadd.f32 %v176, 1.0
      %v233 = vlog2.pop %v232
      %v234 = vmul.f32 %v233, 0.6931472
      %v235 = vmul.f32 -0.5, %v176
      %v236 = vadd.f32 %v235, 1.0
      %v237 = vmul.f32 %v236, %v176
      %v238 = vand.u32 2147483647, %v176
      %vm239 = vcmp.lt.f32.partialorder %v238, 0.0004427343
      %v240 = vsel %vm239, %v237, %v234
      %v241 = vadd.f32 %v201, %v213
      %v242 = vadd.f32 %v202, %v222
      %v243 = vadd.f32 %v203, %v231
      %v244 = vadd.f32 %v204, %v240
      %vm245 = vcmp.ge.f32.partialorder %v93, 0.0
      %vm246 = vcmp.ge.f32.partialorder %v94, 0.0
      %vm247 = vcmp.ge.f32.partialorder %v95, 0.0
      %vm248 = vcmp.ge.f32.partialorder %v96, 0.0
      %v249 = vsel %vm245, 1.0, %v170
      %v250 = vsel %vm246, 1.0, %v172
      %v251 = vsel %vm247, 1.0, %v174
      %v252 = vsel %vm248, 1.0, %v176
      %v253 = vadd.f32 %v170, 1.0
      %v254 = vadd.f32 %v172, 1.0
      %v255 = vadd.f32 %v174, 1.0
      %v256 = vadd.f32 %v176, 1.0
      %v257 = vrcp.pop %v253
      %v258 = vrcp.pop %v254
      %v259 = vrcp.pop %v255
      %v260 = vrcp.pop %v256
      %v261 = vmul.f32 %v249, %v257
      %v262 = vmul.f32 %v250, %v258
      %v263 = vmul.f32 %v251, %v259
      %v264 = vmul.f32 %v252, %v260
      %v273 = vcombine.low %v145, %v146
      %v274 = vcombine.low %v147, %v148
      %v275 = vcombine.low %v149, %v150
      %v276 = vcombine.low %v151, %v152
      %v281 = vmul.f32 %v261, %v273
      %v282 = vmul.f32 %v262, %v274
      %v283 = vmul.f32 %v263, %v275
      %v284 = vmul.f32 %v264, %v276
      %v285 = vmul.f32 %v241, %v273
      %v286 = vmul.f32 %v242, %v274
      %v287 = vmul.f32 %v243, %v275
      %v288 = vmul.f32 %v244, %v276
      %v289 = vadd.f32 %v285, %v286
      %v290 = vadd.f32 %v289, %v287
      %v291 = vadd.f32 %v290, %v288
      %v292 = vrot.slane %v291, 4
      %v293 = vadd.f32 %v291, %v292
      %v294 = vrot.slane %v293, 2
      %v295 = vadd.f32 %v293, %v294
      %v296 = vrot.slane %v295, 1
      %v297 = vadd.f32 %v295, %v296
      %v298 = vadd.f32 %v273, %v274
      %v299 = vadd.f32 %v298, %v275
      %v300 = vadd.f32 %v299, %v276
      %v301 = vrot.slane %v300, 4
      %v302 = vadd.f32 %v300, %v301
      %v303 = vrot.slane %v302, 2
      %v304 = vadd.f32 %v302, %v303
      %v305 = vrot.slane %v304, 1
      %v306 = vadd.f32 %v304, %v305
      %v307 = vmul.f32 %v281, %v189
      %v308 = vmul.f32 %v282, %v190
      %v309 = vmul.f32 %v283, %v191
      %v310 = vmul.f32 %v284, %v192
      %v311 = vadd.f32 %v307, %v308
      %v312 = vadd.f32 %v311, %v309
      %v313 = vadd.f32 %v312, %v310
      %v314 = vrot.slane %v313, 4
      %v315 = vadd.f32 %v313, %v314
      %v316 = vrot.slane %v315, 2
      %v317 = vadd.f32 %v315, %v316
      %v318 = vrot.slane %v317, 1
      %v319 = vadd.f32 %v317, %v318
      %v320 = vadd.f32 %v281, %v282
      %v321 = vadd.f32 %v320, %v283
      %v322 = vadd.f32 %v321, %v284
      %v323 = vrot.slane %v322, 4
      %v324 = vadd.f32 %v322, %v323
      %v325 = vrot.slane %v324, 2
      %v326 = vadd.f32 %v324, %v325
      %v327 = vrot.slane %v326, 1
      %v328 = vadd.f32 %v326, %v327
      %v329 = vadd.f32 %v189, %v190
      %v330 = vadd.f32 %v329, %v191
      %v331 = vadd.f32 %v330, %v192
      %v332 = vrot.slane %v331, 4
      %v333 = vadd.f32 %v331, %v332
      %v334 = vrot.slane %v333, 2
      %v335 = vadd.f32 %v333, %v334
      %v336 = vrot.slane %v335, 1
      %v337 = vadd.f32 %v335, %v336
      %vm338 = vcmask 1040384
      %v339 = vsel %vm338, %v297, %v306
      %vm340 = vcmask 1041408
      %v341 = vsel %vm340, %v339, %v319
      %vm342 = vcmask 1042432
      %v343 = vsel %vm342, %v341, %v328
      %vm344 = vcmask 1043456
      %v345 = vsel %vm344, %v343, %v337
      %vm346 = vcmask 1044480
      %v347 = vsel %vm346, %v345, 0.0
      %vm348 = vcmask 1045504
      %v349 = vsel %vm348, %v347, 0.0
      %vm350 = vcmask 1046528
      %v351 = vsel %vm350, %v349, 0.0
      %v352 = vld [vmem:[#allocation5] sm:$0xff]
      %v353 = vadd.f32 %v352, %v351
      %354 = vst [vmem:[#allocation5] sm:$0xff] %v353
    $region21: #{tpu_custom_call.1} parent=1 // pred_fallthru
      _
    %p355 = scmp.gt.s32.totalorder %s88, 4
    %p356 = scmp.lt.s32.totalorder %s87, 4
    %p357 = pnand %p355, %p356
    %p358 = pneg %p357
    // Predicated region
    $region22: #{tpu_custom_call.1} parent=1 // pred_check
      _
    $region23: #{tpu_custom_call.1} parent=1 // pred_check_branch
      %360 = sbr.rel (%p357) target = $region25
    $region24: #{tpu_custom_call.1} parent=1 // pred_region
      %v361 = vld [vmem:[#allocation2] sm:$0xff]
      %v362 = vld [vmem:[#allocation2 + $0x8] sm:$0xff]
      %v363 = vld [vmem:[#allocation2 + $0x10] sm:$0xff]
      %v364 = vld [vmem:[#allocation2 + $0x18] sm:$0xff]
      %v365 = vld [vmem:[%s74] sm:$0x1]
      %v366 = vld [vmem:[%s74 + $0x1] sm:$0x1]
      %v367 = vld [vmem:[%s74 + $0x2] sm:$0x1]
      %v368 = vld [vmem:[%s74 + $0x3] sm:$0x1]
      %v369 = vld [vmem:[%s74 + $0x4] sm:$0x1]
      %v370 = vld [vmem:[%s74 + $0x5] sm:$0x1]
      %v371 = vld [vmem:[%s74 + $0x6] sm:$0x1]
      %v372 = vld [vmem:[%s74 + $0x7] sm:$0x1]
      %v373 = vunpack.c.0.s8 %v365
      %v374 = vunpack.c.0.s8 %v366
      %v375 = vunpack.c.0.s8 %v367
      %v376 = vunpack.c.0.s8 %v368
      %v377 = vunpack.c.0.s8 %v369
      %v378 = vunpack.c.0.s8 %v370
      %v379 = vunpack.c.0.s8 %v371
      %v380 = vunpack.c.0.s8 %v372
      %v381 = vand.u32 %v373, 255
      %v382 = vand.u32 %v374, 255
      %v383 = vand.u32 %v375, 255
      %v384 = vand.u32 %v376, 255
      %v385 = vand.u32 %v377, 255
      %v386 = vand.u32 %v378, 255
      %v387 = vand.u32 %v379, 255
      %v388 = vand.u32 %v380, 255
      %v389 = vcvt.s32.f32 %v381
      %v390 = vcvt.s32.f32 %v382
      %v391 = vcvt.s32.f32 %v383
      %v392 = vcvt.s32.f32 %v384
      %v393 = vcvt.s32.f32 %v385
      %v394 = vcvt.s32.f32 %v386
      %v395 = vcvt.s32.f32 %v387
      %v396 = vcvt.s32.f32 %v388
      %vm397 = vcmp.ne.f32.partialorder %v389, 255.0
      %vm398 = vcmp.ne.f32.partialorder %v390, 255.0
      %vm399 = vcmp.ne.f32.partialorder %v391, 255.0
      %vm400 = vcmp.ne.f32.partialorder %v392, 255.0
      %vm401 = vcmp.ne.f32.partialorder %v393, 255.0
      %vm402 = vcmp.ne.f32.partialorder %v394, 255.0
      %vm403 = vcmp.ne.f32.partialorder %v395, 255.0
      %vm404 = vcmp.ne.f32.partialorder %v396, 255.0
      %v405 = vlaneseq
      %v406 = vshrl.u32 %v405, 7
      %v407 = vadd.s32 %v406, 8
      %v408 = vadd.s32 %v406, 16
      %v409 = vadd.s32 %v406, 24
      %v410 = vstv %s87
      %v411 = vadd.s32 %v406, %v410
      %v412 = vadd.s32 %v407, %v410
      %v413 = vadd.s32 %v408, %v410
      %v414 = vadd.s32 %v409, %v410
      %vm415 = vcmp.lt.s32.totalorder %v411, 4
      %vm416 = vcmp.lt.s32.totalorder %v412, 4
      %vm417 = vcmp.lt.s32.totalorder %v413, 4
      %vm418 = vcmp.lt.s32.totalorder %v414, 4
      %v419 = vsel %vm415, 1, 0
      %v420 = vsel %vm416, 1, 0
      %v421 = vsel %vm417, 1, 0
      %v422 = vsel %vm418, 1, 0
      %v424 = vunpack.c.l.s4 839922192
      %v425 = vunpack.c.0.s8 %v424
      %v426 = vlaneseq
      %v427 = vshrl.u32 %v426, 7
      %v428 = vsub.s32 %v425, %v427
      %v429 = vrot.slane %v419, %v428
      %v431 = vunpack.c.l.s4 1985246804
      %v432 = vunpack.c.0.s8 %v431
      %v433 = vlaneseq
      %v434 = vshrl.u32 %v433, 7
      %v435 = vsub.s32 %v432, %v434
      %v436 = vrot.slane %v419, %v435
      %v438 = vunpack.c.l.s4 839922192
      %v439 = vunpack.c.0.s8 %v438
      %v440 = vlaneseq
      %v441 = vshrl.u32 %v440, 7
      %v442 = vsub.s32 %v439, %v441
      %v443 = vrot.slane %v420, %v442
      %v445 = vunpack.c.l.s4 1985246804
      %v446 = vunpack.c.0.s8 %v445
      %v447 = vlaneseq
      %v448 = vshrl.u32 %v447, 7
      %v449 = vsub.s32 %v446, %v448
      %v450 = vrot.slane %v420, %v449
      %v452 = vunpack.c.l.s4 839922192
      %v453 = vunpack.c.0.s8 %v452
      %v454 = vlaneseq
      %v455 = vshrl.u32 %v454, 7
      %v456 = vsub.s32 %v453, %v455
      %v457 = vrot.slane %v421, %v456
      %v459 = vunpack.c.l.s4 1985246804
      %v460 = vunpack.c.0.s8 %v459
      %v461 = vlaneseq
      %v462 = vshrl.u32 %v461, 7
      %v463 = vsub.s32 %v460, %v462
      %v464 = vrot.slane %v421, %v463
      %v466 = vunpack.c.l.s4 839922192
      %v467 = vunpack.c.0.s8 %v466
      %v468 = vlaneseq
      %v469 = vshrl.u32 %v468, 7
      %v470 = vsub.s32 %v467, %v469
      %v471 = vrot.slane %v422, %v470
      %v473 = vunpack.c.l.s4 1985246804
      %v474 = vunpack.c.0.s8 %v473
      %v475 = vlaneseq
      %v476 = vshrl.u32 %v475, 7
      %v477 = vsub.s32 %v474, %v476
      %v478 = vrot.slane %v422, %v477
      %vm479 = vcmp.ne.s32.totalorder %v429, 0
      %vm480 = vcmp.ne.s32.totalorder %v436, 0
      %vm481 = vcmp.ne.s32.totalorder %v443, 0
      %vm482 = vcmp.ne.s32.totalorder %v450, 0
      %vm483 = vcmp.ne.s32.totalorder %v457, 0
      %vm484 = vcmp.ne.s32.totalorder %v464, 0
      %vm485 = vcmp.ne.s32.totalorder %v471, 0
      %vm486 = vcmp.ne.s32.totalorder %v478, 0
      %vm487 = vmand %vm397, %vm479
      %vm488 = vmand %vm398, %vm480
      %vm489 = vmand %vm399, %vm481
      %vm490 = vmand %vm400, %vm482
      %vm491 = vmand %vm401, %vm483
      %vm492 = vmand %vm402, %vm484
      %vm493 = vmand %vm403, %vm485
      %vm494 = vmand %vm404, %vm486
      %v499 = vcombine.high %v361, %v361
      %v500 = vcombine.high %v362, %v362
      %v501 = vcombine.high %v363, %v363
      %v502 = vcombine.high %v364, %v364
      %v507 = vsel %vm487, %v361, 0.0
      %v508 = vsel %vm488, %v499, 0.0
      %v509 = vsel %vm489, %v362, 0.0
      %v510 = vsel %vm490, %v500, 0.0
      %v511 = vsel %vm491, %v363, 0.0
      %v512 = vsel %vm492, %v501, 0.0
      %v513 = vsel %vm493, %v364, 0.0
      %v514 = vsel %vm494, %v502, 0.0
      %v515 = vsel %vm487, 1, 0
      %v516 = vsel %vm488, 1, 0
      %v517 = vsel %vm489, 1, 0
      %v518 = vsel %vm490, 1, 0
      %v519 = vsel %vm491, 1, 0
      %v520 = vsel %vm492, 1, 0
      %v521 = vsel %vm493, 1, 0
      %v522 = vsel %vm494, 1, 0
      %v523 = vcvt.s32.f32 %v515
      %v524 = vcvt.s32.f32 %v516
      %v525 = vcvt.s32.f32 %v517
      %v526 = vcvt.s32.f32 %v518
      %v527 = vcvt.s32.f32 %v519
      %v528 = vcvt.s32.f32 %v520
      %v529 = vcvt.s32.f32 %v521
      %v530 = vcvt.s32.f32 %v522
      %v531 = vsel %vm487, %v389, 0.0
      %v532 = vsel %vm488, %v390, 0.0
      %v533 = vsel %vm489, %v391, 0.0
      %v534 = vsel %vm490, %v392, 0.0
      %v535 = vsel %vm491, %v393, 0.0
      %v536 = vsel %vm492, %v394, 0.0
      %v537 = vsel %vm493, %v395, 0.0
      %v538 = vsel %vm494, %v396, 0.0
      %v539 = vand.u32 2147483647, %v507
      %v540 = vand.u32 2147483647, %v508
      %v541 = vand.u32 2147483647, %v509
      %v542 = vand.u32 2147483647, %v510
      %v543 = vand.u32 2147483647, %v511
      %v544 = vand.u32 2147483647, %v512
      %v545 = vand.u32 2147483647, %v513
      %v546 = vand.u32 2147483647, %v514
      %v547 = vsub.f32 0.0, %v539
      %v548 = vsub.f32 0.0, %v540
      %v549 = vsub.f32 0.0, %v541
      %v550 = vsub.f32 0.0, %v542
      %v551 = vsub.f32 0.0, %v543
      %v552 = vsub.f32 0.0, %v544
      %v553 = vsub.f32 0.0, %v545
      %v554 = vsub.f32 0.0, %v546
      %v555 = vmul.f32 %v547, 1.442695
      %v556 = vpow.pop %v555
      %v557 = vmul.f32 %v548, 1.442695
      %v558 = vpow.pop %v557
      %v559 = vmul.f32 %v549, 1.442695
      %v560 = vpow.pop %v559
      %v561 = vmul.f32 %v550, 1.442695
      %v562 = vpow.pop %v561
      %v563 = vmul.f32 %v551, 1.442695
      %v564 = vpow.pop %v563
      %v565 = vmul.f32 %v552, 1.442695
      %v566 = vpow.pop %v565
      %v567 = vmul.f32 %v553, 1.442695
      %v568 = vpow.pop %v567
      %v569 = vmul.f32 %v554, 1.442695
      %v570 = vpow.pop %v569
      %v571 = vmax.f32 %v507, 0.0
      %v572 = vmax.f32 %v508, 0.0
      %v573 = vmax.f32 %v509, 0.0
      %v574 = vmax.f32 %v510, 0.0
      %v575 = vmax.f32 %v511, 0.0
      %v576 = vmax.f32 %v512, 0.0
      %v577 = vmax.f32 %v513, 0.0
      %v578 = vmax.f32 %v514, 0.0
      %v579 = vmul.f32 %v507, %v531
      %v580 = vmul.f32 %v508, %v532
      %v581 = vmul.f32 %v509, %v533
      %v582 = vmul.f32 %v510, %v534
      %v583 = vmul.f32 %v511, %v535
      %v584 = vmul.f32 %v512, %v536
      %v585 = vmul.f32 %v513, %v537
      %v586 = vmul.f32 %v514, %v538
      %v587 = vsub.f32 %v571, %v579
      %v588 = vsub.f32 %v572, %v580
      %v589 = vsub.f32 %v573, %v581
      %v590 = vsub.f32 %v574, %v582
      %v591 = vsub.f32 %v575, %v583
      %v592 = vsub.f32 %v576, %v584
      %v593 = vsub.f32 %v577, %v585
      %v594 = vsub.f32 %v578, %v586
      %v595 = vadd.f32 %v556, 1.0
      %v596 = vlog2.pop %v595
      %v597 = vmul.f32 %v596, 0.6931472
      %v598 = vmul.f32 -0.5, %v556
      %v599 = vadd.f32 %v598, 1.0
      %v600 = vmul.f32 %v599, %v556
      %v601 = vand.u32 2147483647, %v556
      %vm602 = vcmp.lt.f32.partialorder %v601, 0.0004427343
      %v603 = vsel %vm602, %v600, %v597
      %v604 = vadd.f32 %v558, 1.0
      %v605 = vlog2.pop %v604
      %v606 = vmul.f32 %v605, 0.6931472
      %v607 = vmul.f32 -0.5, %v558
      %v608 = vadd.f32 %v607, 1.0
      %v609 = vmul.f32 %v608, %v558
      %v610 = vand.u32 2147483647, %v558
      %vm611 = vcmp.lt.f32.partialorder %v610, 0.0004427343
      %v612 = vsel %vm611, %v609, %v606
      %v613 = vadd.f32 %v560, 1.0
      %v614 = vlog2.pop %v613
      %v615 = vmul.f32 %v614, 0.6931472
      %v616 = vmul.f32 -0.5, %v560
      %v617 = vadd.f32 %v616, 1.0
      %v618 = vmul.f32 %v617, %v560
      %v619 = vand.u32 2147483647, %v560
      %vm620 = vcmp.lt.f32.partialorder %v619, 0.0004427343
      %v621 = vsel %vm620, %v618, %v615
      %v622 = vadd.f32 %v562, 1.0
      %v623 = vlog2.pop %v622
      %v624 = vmul.f32 %v623, 0.6931472
      %v625 = vmul.f32 -0.5, %v562
      %v626 = vadd.f32 %v625, 1.0
      %v627 = vmul.f32 %v626, %v562
      %v628 = vand.u32 2147483647, %v562
      %vm629 = vcmp.lt.f32.partialorder %v628, 0.0004427343
      %v630 = vsel %vm629, %v627, %v624
      %v631 = vadd.f32 %v564, 1.0
      %v632 = vlog2.pop %v631
      %v633 = vmul.f32 %v632, 0.6931472
      %v634 = vmul.f32 -0.5, %v564
      %v635 = vadd.f32 %v634, 1.0
      %v636 = vmul.f32 %v635, %v564
      %v637 = vand.u32 2147483647, %v564
      %vm638 = vcmp.lt.f32.partialorder %v637, 0.0004427343
      %v639 = vsel %vm638, %v636, %v633
      %v640 = vadd.f32 %v566, 1.0
      %v641 = vlog2.pop %v640
      %v642 = vmul.f32 %v641, 0.6931472
      %v643 = vmul.f32 -0.5, %v566
      %v644 = vadd.f32 %v643, 1.0
      %v645 = vmul.f32 %v644, %v566
      %v646 = vand.u32 2147483647, %v566
      %vm647 = vcmp.lt.f32.partialorder %v646, 0.0004427343
      %v648 = vsel %vm647, %v645, %v642
      %v649 = vadd.f32 %v568, 1.0
      %v650 = vlog2.pop %v649
      %v651 = vmul.f32 %v650, 0.6931472
      %v652 = vmul.f32 -0.5, %v568
      %v653 = vadd.f32 %v652, 1.0
      %v654 = vmul.f32 %v653, %v568
      %v655 = vand.u32 2147483647, %v568
      %vm656 = vcmp.lt.f32.partialorder %v655, 0.0004427343
      %v657 = vsel %vm656, %v654, %v651
      %v658 = vadd.f32 %v570, 1.0
      %v659 = vlog2.pop %v658
      %v660 = vmul.f32 %v659, 0.6931472
      %v661 = vmul.f32 -0.5, %v570
      %v662 = vadd.f32 %v661, 1.0
      %v663 = vmul.f32 %v662, %v570
      %v664 = vand.u32 2147483647, %v570
      %vm665 = vcmp.lt.f32.partialorder %v664, 0.0004427343
      %v666 = vsel %vm665, %v663, %v660
      %v667 = vadd.f32 %v587, %v603
      %v668 = vadd.f32 %v588, %v612
      %v669 = vadd.f32 %v589, %v621
      %v670 = vadd.f32 %v590, %v630
      %v671 = vadd.f32 %v591, %v639
      %v672 = vadd.f32 %v592, %v648
      %v673 = vadd.f32 %v593, %v657
      %v674 = vadd.f32 %v594, %v666
      %vm675 = vcmp.ge.f32.partialorder %v507, 0.0
      %vm676 = vcmp.ge.f32.partialorder %v508, 0.0
      %vm677 = vcmp.ge.f32.partialorder %v509, 0.0
      %vm678 = vcmp.ge.f32.partialorder %v510, 0.0
      %vm679 = vcmp.ge.f32.partialorder %v511, 0.0
      %vm680 = vcmp.ge.f32.partialorder %v512, 0.0
      %vm681 = vcmp.ge.f32.partialorder %v513, 0.0
      %vm682 = vcmp.ge.f32.partialorder %v514, 0.0
      %v683 = vsel %vm675, 1.0, %v556
      %v684 = vsel %vm676, 1.0, %v558
      %v685 = vsel %vm677, 1.0, %v560
      %v686 = vsel %vm678, 1.0, %v562
      %v687 = vsel %vm679, 1.0, %v564
      %v688 = vsel %vm680, 1.0, %v566
      %v689 = vsel %vm681, 1.0, %v568
      %v690 = vsel %vm682, 1.0, %v570
      %v691 = vadd.f32 %v556, 1.0
      %v692 = vadd.f32 %v558, 1.0
      %v693 = vadd.f32 %v560, 1.0
      %v694 = vadd.f32 %v562, 1.0
      %v695 = vadd.f32 %v564, 1.0
      %v696 = vadd.f32 %v566, 1.0
      %v697 = vadd.f32 %v568, 1.0
      %v698 = vadd.f32 %v570, 1.0
      %v699 = vrcp.pop %v691
      %v700 = vrcp.pop %v692
      %v701 = vrcp.pop %v693
      %v702 = vrcp.pop %v694
      %v703 = vrcp.pop %v695
      %v704 = vrcp.pop %v696
      %v705 = vrcp.pop %v697
      %v706 = vrcp.pop %v698
      %v707 = vmul.f32 %v683, %v699
      %v708 = vmul.f32 %v684, %v700
      %v709 = vmul.f32 %v685, %v701
      %v710 = vmul.f32 %v686, %v702
      %v711 = vmul.f32 %v687, %v703
      %v712 = vmul.f32 %v688, %v704
      %v713 = vmul.f32 %v689, %v705
      %v714 = vmul.f32 %v690, %v706
      %v715 = vmul.f32 %v707, %v523
      %v716 = vmul.f32 %v708, %v524
      %v717 = vmul.f32 %v709, %v525
      %v718 = vmul.f32 %v710, %v526
      %v719 = vmul.f32 %v711, %v527
      %v720 = vmul.f32 %v712, %v528
      %v721 = vmul.f32 %v713, %v529
      %v722 = vmul.f32 %v714, %v530
      %v723 = vmul.f32 %v667, %v523
      %v724 = vmul.f32 %v668, %v524
      %v725 = vmul.f32 %v669, %v525
      %v726 = vmul.f32 %v670, %v526
      %v727 = vmul.f32 %v671, %v527
      %v728 = vmul.f32 %v672, %v528
      %v729 = vmul.f32 %v673, %v529
      %v730 = vmul.f32 %v674, %v530
      %v739 = vcombine.low %v723, %v724
      %v740 = vcombine.low %v725, %v726
      %v741 = vcombine.low %v727, %v728
      %v742 = vcombine.low %v729, %v730
      %v747 = vadd.f32 %v739, %v740
      %v748 = vadd.f32 %v747, %v741
      %v749 = vadd.f32 %v748, %v742
      %v750 = vrot.slane %v749, 4
      %v751 = vadd.f32 %v749, %v750
      %v752 = vrot.slane %v751, 2
      %v753 = vadd.f32 %v751, %v752
      %v754 = vrot.slane %v753, 1
      %v755 = vadd.f32 %v753, %v754
      %v764 = vcombine.low %v523, %v524
      %v765 = vcombine.low %v525, %v526
      %v766 = vcombine.low %v527, %v528
      %v767 = vcombine.low %v529, %v530
      %v772 = vadd.f32 %v764, %v765
      %v773 = vadd.f32 %v772, %v766
      %v774 = vadd.f32 %v773, %v767
      %v775 = vrot.slane %v774, 4
      %v776 = vadd.f32 %v774, %v775
      %v777 = vrot.slane %v776, 2
      %v778 = vadd.f32 %v776, %v777
      %v779 = vrot.slane %v778, 1
      %v780 = vadd.f32 %v778, %v779
      %v781 = vmul.f32 %v715, %v531
      %v782 = vmul.f32 %v716, %v532
      %v783 = vmul.f32 %v717, %v533
      %v784 = vmul.f32 %v718, %v534
      %v785 = vmul.f32 %v719, %v535
      %v786 = vmul.f32 %v720, %v536
      %v787 = vmul.f32 %v721, %v537
      %v788 = vmul.f32 %v722, %v538
      %v797 = vcombine.low %v781, %v782
      %v798 = vcombine.low %v783, %v784
      %v799 = vcombine.low %v785, %v786
      %v800 = vcombine.low %v787, %v788
      %v805 = vadd.f32 %v797, %v798
      %v806 = vadd.f32 %v805, %v799
      %v807 = vadd.f32 %v806, %v800
      %v808 = vrot.slane %v807, 4
      %v809 = vadd.f32 %v807, %v808
      %v810 = vrot.slane %v809, 2
      %v811 = vadd.f32 %v809, %v810
      %v812 = vrot.slane %v811, 1
      %v813 = vadd.f32 %v811, %v812
      %v822 = vcombine.low %v715, %v716
      %v823 = vcombine.low %v717, %v718
      %v824 = vcombine.low %v719, %v720
      %v825 = vcombine.low %v721, %v722
      %v830 = vadd.f32 %v822, %v823
      %v831 = vadd.f32 %v830, %v824
      %v832 = vadd.f32 %v831, %v825
      %v833 = vrot.slane %v832, 4
      %v834 = vadd.f32 %v832, %v833
      %v835 = vrot.slane %v834, 2
      %v836 = vadd.f32 %v834, %v835
      %v837 = vrot.slane %v836, 1
      %v838 = vadd.f32 %v836, %v837
      %v847 = vcombine.low %v531, %v532
      %v848 = vcombine.low %v533, %v534
      %v849 = vcombine.low %v535, %v536
      %v850 = vcombine.low %v537, %v538
      %v855 = vadd.f32 %v847, %v848
      %v856 = vadd.f32 %v855, %v849
      %v857 = vadd.f32 %v856, %v850
      %v858 = vrot.slane %v857, 4
      %v859 = vadd.f32 %v857, %v858
      %v860 = vrot.slane %v859, 2
      %v861 = vadd.f32 %v859, %v860
      %v862 = vrot.slane %v861, 1
      %v863 = vadd.f32 %v861, %v862
      %vm864 = vcmask 1040384
      %v865 = vsel %vm864, %v755, %v780
      %vm866 = vcmask 1041408
      %v867 = vsel %vm866, %v865, %v813
      %vm868 = vcmask 1042432
      %v869 = vsel %vm868, %v867, %v838
      %vm870 = vcmask 1043456
      %v871 = vsel %vm870, %v869, %v863
      %vm872 = vcmask 1044480
      %v873 = vsel %vm872, %v871, 0.0
      %vm874 = vcmask 1045504
      %v875 = vsel %vm874, %v873, 0.0
      %vm876 = vcmask 1046528
      %v877 = vsel %vm876, %v875, 0.0
      %v878 = vld [vmem:[#allocation5] sm:$0xff]
      %v879 = vadd.f32 %v878, %v877
      %880 = vst [vmem:[#allocation5] sm:$0xff] %v879
    $region25: #{tpu_custom_call.1} parent=1 // pred_fallthru
      _
    // Predicated region
    $region26: #{tpu_custom_call.1} parent=1 // pred_check
      _
    $region27: #{tpu_custom_call.1} parent=1 // pred_check_branch
      %882 = sbr.rel (0) target = $region29
    $region28: #{tpu_custom_call.1} parent=1 // pred_region
      %s884 = ssub.s32 128, 128
      %885 = vsyncadd [#allocation4], %s884
      %s887 = sshll.u32 [#allocation5], 4
      %s888 = int_to_ptr.vmem [resolvable:$true] %s887
      %890 = dma.vmem_to_hbm [thread:$0]  %s888, 128, %s2, [#allocation4]
    $region29: #{tpu_custom_call.1} parent=1 // pred_fallthru
      _
    // Predicated region
    $region30: #{tpu_custom_call.1} parent=1 // pred_check
      _
    $region31: #{tpu_custom_call.1} parent=1 // pred_check_branch
      %892 = sbr.rel (0) target = $region33
    $region32: #{tpu_custom_call.1} parent=1 // pred_region
      %893 = dma.done [#allocation4], 128
    $region33: #{tpu_custom_call.1} parent=1 // pred_fallthru
      _
    %894 = vsyncpa [#allocation3], 1
    %895 = vsyncpa [#allocation4], 1

</llo_original>
